<compile_context>
chip_gen: v7x
topology: tpu7x:2x2x1
jax: 0.10.0
libtpu: 0.0.40
codegen_flags: <defaults>
</compile_context>

<pallas_src>
import functools

import jax
import jax.numpy as jnp
from jax import lax
from jax.experimental import pallas as pl
from jax.experimental.pallas import tpu as pltpu

_LANES = 128
_SUBLANES = 8


def _l1_epe_kernel(o_ref, t_ref, abs_ref, epe_ref, *, n_batch, n_chan, rows,
                   r_block, blocks_per_split, needs_mask):
    split = pl.program_id(0)   # "parallel" axis: one slice per TensorCore
    step = pl.program_id(1)    # "arbitrary" axis: row-blocks within the slice

    @pl.when(step == 0)
    def _init():
        abs_ref[...] = jnp.zeros_like(abs_ref)
        epe_ref[...] = jnp.zeros_like(epe_ref)

    # (N*C, r_block, 128) block; cast to f32 inside the kernel (no wrapper cast).
    diff = o_ref[...].astype(jnp.float32) - t_ref[...].astype(jnp.float32)

    if needs_mask:
        # Tail / duplicated blocks: zero out rows past the true row count
        # before abs/square so garbage from the partially-out-of-bounds edge
        # DMA (or the clamped duplicate block) never reaches the accumulators.
        row_start = (split * blocks_per_split + step) * r_block
        row_ids = lax.broadcasted_iota(jnp.int32, (1, r_block, _LANES), 1)
        diff = jnp.where(row_start + row_ids < rows, diff, 0.0)

    # L1 partial: |diff| reduced over the N*C leading axis (pure VPU vreg adds)
    # into the lane-dense (1, r_block, 128) resident output accumulator.
    abs_ref[...] += jnp.sum(jnp.abs(diff), axis=0, keepdims=True)

    # EPE partial: per-pixel channel reduce (leading-axis VPU adds), sqrt on
    # the EUP, then batch reduce (VPU) into the accumulator.
    sq = jnp.sum(jnp.square(diff).reshape(n_batch, n_chan, r_block, _LANES),
                 axis=1)
    epe_ref[...] += jnp.sum(jnp.sqrt(sq), axis=0, keepdims=True)


def l1_loss_forward(output, target, *, vmem_budget_bytes=40 << 20,
                    num_splits=2):
    """Pallas implementation of flownet2 L1Loss.forward: returns [L1, EPE]."""
    assert output.shape == target.shape
    N, C, H, W = output.shape
    NC = N * C
    P = H * W

    total_elems = N * C * P      # L1 divisor (true element count)
    total_pixels = N * P         # EPE divisor (true pixel count)

    itemsize = jnp.dtype(output.dtype).itemsize
    tile = max(_SUBLANES, 32 // itemsize)        # native sublane tile: 8/16/32
    rows = -(-P // _LANES)                       # 128-lane rows per (n, c)

    # Per-row VMEM cost of one pipeline step:
    #   2 inputs x 2 buffers x input itemsize + ~3 block-sized f32 temporaries.
    bytes_per_row = NC * _LANES * (4 * itemsize + 3 * 4)
    r_cap = max(tile, (vmem_budget_bytes // bytes_per_row) // tile * tile)
    if rows <= r_cap:
        r_block = rows           # full-extent block: exempt from (8,128) rule
        num_blocks = 1
    else:
        r_block = r_cap
        num_blocks = -(-rows // r_block)

    # Leading "parallel" axis: v7x has 2 TensorCores; a size-2 axis is
    # harmless (runs sequentially) on v5e/v6e's single core.
    num_splits = max(1, min(num_splits, num_blocks))
    blocks_per_split = -(-num_blocks // num_splits)
    needs_mask = num_splits * blocks_per_split * r_block != rows

    def _prep(x):
        # NCHW is channel-contiguous: only free reshapes.  A copy happens only
        # when H*W is not 128-aligned (zero lane-pad; zeros contribute 0 to
        # both sums and the divisors use the true counts).
        x2 = x.reshape(NC, P)
        if rows * _LANES != P:
            # TODO(synk): drop this last copy too by masking lanes in-kernel
            # on a 2-D (NC, P) layout.
            x2 = jnp.pad(x2, ((0, 0), (0, rows * _LANES - P)))
        return x2.reshape(NC, rows, _LANES)

    o3 = _prep(output)
    t3 = _prep(target)

    kernel = functools.partial(
        _l1_epe_kernel,
        n_batch=N, n_chan=C, rows=rows, r_block=r_block,
        blocks_per_split=blocks_per_split, needs_mask=needs_mask,
    )

    def in_index(c, i):
        # Clamp so trailing (duplicate) iterations re-read a valid block; their
        # rows are fully masked inside the kernel so they contribute 0.
        return (0, jnp.minimum(c * blocks_per_split + i, num_blocks - 1), 0)

    in_spec = pl.BlockSpec((NC, r_block, _LANES), in_index)
    out_spec = pl.BlockSpec((1, r_block, _LANES), lambda c, i: (c, 0, 0))

    # VMEM request = actual step footprint + headroom; with the default budget
    # this stays < 48 MiB, fitting v7x's 64 MiB VMEM as well as v5e/v6e.
    # TODO(synk): for very large N*C add a grid axis over N (keep C whole) so
    # the minimum (NC, tile, 128) block cannot blow past the VMEM limit.
    block_in = NC * r_block * _LANES * itemsize
    block_f32 = NC * r_block * _LANES * 4
    out_block = r_block * _LANES * 4
    vmem_limit = max(32 << 20,
                     4 * block_in + 3 * block_f32 + 4 * out_block + (2 << 20))

    abs_parts, epe_parts = pl.pallas_call(
        kernel,
        out_shape=(
            jax.ShapeDtypeStruct((num_splits, r_block, _LANES), jnp.float32),
            jax.ShapeDtypeStruct((num_splits, r_block, _LANES), jnp.float32),
        ),
        grid=(num_splits, blocks_per_split),
        in_specs=[in_spec, in_spec],
        out_specs=(out_spec, out_spec),
        compiler_params=pltpu.CompilerParams(
            dimension_semantics=("parallel", "arbitrary"),
            vmem_limit_bytes=int(vmem_limit),
        ),
        cost_estimate=pl.CostEstimate(
            flops=5 * total_elems,
            transcendentals=total_pixels,
            bytes_accessed=2 * total_elems * itemsize
                           + 2 * num_splits * r_block * _LANES * 4,
        ),
    )(o3, t3)

    # Final combine of per-core partial sums + divide by the true counts
    # (tiny XLA reduce; avoids any cross-core write race on a shared scalar).
    l1 = jnp.sum(abs_parts) * (1.0 / float(total_elems))
    epe = jnp.sum(epe_parts) * (1.0 / float(total_pixels))
    return [l1, epe]


def _reference(output, target):
    diff = output.astype(jnp.float32) - target.astype(jnp.float32)
    l1 = jnp.mean(jnp.abs(diff))
    epe = jnp.mean(jnp.sqrt(jnp.sum(diff * diff, axis=1)))
    return l1, epe


if __name__ == "__main__":
    key = jax.random.PRNGKey(0)

    # Flow-style NCHW tensors, small shapes exercising every tiling path.
    cases = [
        ((2, 4, 16, 16), jnp.float32, {}),                       # single block
        ((2, 2, 72, 64), jnp.float32,                            # multi-block,
         dict(vmem_budget_bytes=256 * 1024)),                    #  tail mask + 2-way split
        ((1, 2, 6, 20), jnp.float32, {}),                        # lane-padded pixel axis
        ((2, 2, 64, 64), jnp.bfloat16,                           # bf16 tiling path
         dict(vmem_budget_bytes=256 * 1024)),
    ]
    for shape, dtype, kwargs in cases:
        key, k1, k2 = jax.random.split(key, 3)
        output = jax.random.normal(k1, shape, dtype=jnp.float32).astype(dtype)
        target = jax.random.normal(k2, shape, dtype=jnp.float32).astype(dtype)

        l1_val, epe_val = l1_loss_forward(output, target, **kwargs)
        jax.block_until_ready(l1_val)
        jax.block_until_ready(epe_val)

        ref_l1, ref_epe = _reference(output, target)
        tol = 1e-5 if dtype == jnp.float32 else 5e-3
        assert jnp.allclose(l1_val, ref_l1, atol=tol, rtol=tol), (shape, dtype)
        assert jnp.allclose(epe_val, ref_epe, atol=tol, rtol=tol), (shape, dtype)

    print("KERNEL_OK")
</pallas_src>

<mosaic_0001>
module attributes {stable_mosaic.version = 11 : i64} {
  func.func @_l1_epe_kernel(%arg0: i32, %arg1: i32, %arg2: memref<8x2x128xf32, #tpu.memory_space<vmem>>, %arg3: memref<8x2x128xf32, #tpu.memory_space<vmem>>, %arg4: memref<1x2x128xf32, #tpu.memory_space<vmem>>, %arg5: memref<1x2x128xf32, #tpu.memory_space<vmem>>) attributes {dimension_semantics = [#tpu.dimension_semantics<parallel>, #tpu.dimension_semantics<arbitrary>], iteration_bounds = array<i64: 1, 1>, scalar_prefetch = 0 : i64, scratch_operands = 0 : i64, tpu.core_type = #tpu.core_type<tc>, window_params = [{transform_indices = @transform_0, window_bounds = array<i64: 8, 2, 128>}, {transform_indices = @transform_1, window_bounds = array<i64: 8, 2, 128>}, {transform_indices = @transform_2, window_bounds = array<i64: 1, 2, 128>}, {transform_indices = @transform_3, window_bounds = array<i64: 1, 2, 128>}]} {
    %c0_i32 = arith.constant 0 : i32
    %0 = arith.cmpi eq, %arg1, %c0_i32 : i32
    %1 = arith.extui %0 : i1 to i32
    %c0_i32_0 = arith.constant 0 : i32
    %2 = arith.cmpi ne, %1, %c0_i32_0 : i32
    scf.if %2 {
      %cst_20 = arith.constant 0.000000e+00 : f32
      %21 = vector.broadcast %cst_20 : f32 to vector<1x2x128xf32>
      %c0_21 = arith.constant 0 : index
      %c0_22 = arith.constant 0 : index
      %c0_23 = arith.constant 0 : index
      %22 = vector.load %arg4[%c0_21, %c0_22, %c0_23] : memref<1x2x128xf32, #tpu.memory_space<vmem>>, vector<1x2x128xf32>
      tpu.vector_store %arg4[%c0_21, %c0_22, %c0_23], %21 {strides = array<i32>} : memref<1x2x128xf32, #tpu.memory_space<vmem>>, vector<1x2x128xf32>,
      %cst_24 = arith.constant 0.000000e+00 : f32
      %23 = vector.broadcast %cst_24 : f32 to vector<1x2x128xf32>
      %c0_25 = arith.constant 0 : index
      %c0_26 = arith.constant 0 : index
      %c0_27 = arith.constant 0 : index
      %24 = vector.load %arg5[%c0_25, %c0_26, %c0_27] : memref<1x2x128xf32, #tpu.memory_space<vmem>>, vector<1x2x128xf32>
      tpu.vector_store %arg5[%c0_25, %c0_26, %c0_27], %23 {strides = array<i32>} : memref<1x2x128xf32, #tpu.memory_space<vmem>>, vector<1x2x128xf32>,
    } else {
    }
    %c0 = arith.constant 0 : index
    %c0_1 = arith.constant 0 : index
    %c0_2 = arith.constant 0 : index
    %3 = vector.load %arg2[%c0, %c0_1, %c0_2] : memref<8x2x128xf32, #tpu.memory_space<vmem>>, vector<8x2x128xf32>
    %c0_3 = arith.constant 0 : index
    %c0_4 = arith.constant 0 : index
    %c0_5 = arith.constant 0 : index
    %4 = vector.load %arg3[%c0_3, %c0_4, %c0_5] : memref<8x2x128xf32, #tpu.memory_space<vmem>>, vector<8x2x128xf32>
    %5 = arith.subf %3, %4 : vector<8x2x128xf32>
    %c0_6 = arith.constant 0 : index
    %c0_7 = arith.constant 0 : index
    %c0_8 = arith.constant 0 : index
    %6 = vector.load %arg4[%c0_6, %c0_7, %c0_8] : memref<1x2x128xf32, #tpu.memory_space<vmem>>, vector<1x2x128xf32>
    %7 = math.absf %5 : vector<8x2x128xf32>
    %cst = arith.constant dense<0.000000e+00> : vector<2x128xf32>
    %8 = vector.multi_reduction <add>, %7, %cst [0] : vector<8x2x128xf32> to vector<2x128xf32>
    %9 = vector.shape_cast %8 : vector<2x128xf32> to vector<1x2x128xf32>
    %10 = arith.addf %6, %9 : vector<1x2x128xf32>
    %c0_9 = arith.constant 0 : index
    %c0_10 = arith.constant 0 : index
    %c0_11 = arith.constant 0 : index
    %11 = vector.load %arg4[%c0_9, %c0_10, %c0_11] : memref<1x2x128xf32, #tpu.memory_space<vmem>>, vector<1x2x128xf32>
    tpu.vector_store %arg4[%c0_9, %c0_10, %c0_11], %10 {strides = array<i32>} : memref<1x2x128xf32, #tpu.memory_space<vmem>>, vector<1x2x128xf32>,
    %12 = arith.mulf %5, %5 : vector<8x2x128xf32>
    %13 = vector.shape_cast %12 : vector<8x2x128xf32> to vector<2x4x2x128xf32>
    %cst_12 = arith.constant dense<0.000000e+00> : vector<2x2x128xf32>
    %14 = vector.multi_reduction <add>, %13, %cst_12 [1] : vector<2x4x2x128xf32> to vector<2x2x128xf32>
    %c0_13 = arith.constant 0 : index
    %c0_14 = arith.constant 0 : index
    %c0_15 = arith.constant 0 : index
    %15 = vector.load %arg5[%c0_13, %c0_14, %c0_15] : memref<1x2x128xf32, #tpu.memory_space<vmem>>, vector<1x2x128xf32>
    %16 = math.sqrt %14 : vector<2x2x128xf32>
    %cst_16 = arith.constant dense<0.000000e+00> : vector<2x128xf32>
    %17 = vector.multi_reduction <add>, %16, %cst_16 [0] : vector<2x2x128xf32> to vector<2x128xf32>
    %18 = vector.shape_cast %17 : vector<2x128xf32> to vector<1x2x128xf32>
    %19 = arith.addf %15, %18 : vector<1x2x128xf32>
    %c0_17 = arith.constant 0 : index
    %c0_18 = arith.constant 0 : index
    %c0_19 = arith.constant 0 : index
    %20 = vector.load %arg5[%c0_17, %c0_18, %c0_19] : memref<1x2x128xf32, #tpu.memory_space<vmem>>, vector<1x2x128xf32>
    tpu.vector_store %arg5[%c0_17, %c0_18, %c0_19], %19 {strides = array<i32>} : memref<1x2x128xf32, #tpu.memory_space<vmem>>, vector<1x2x128xf32>,
    return
  }
  func.func @transform_0(%arg0: i32, %arg1: i32) -> (i32, i32, i32) {
    %c1_i32 = arith.constant 1 : i32
    %0 = arith.muli %arg0, %c1_i32 : i32
    %1 = arith.addi %0, %arg1 : i32
    %c0_i32 = arith.constant 0 : i32
    %2 = arith.minsi %1, %c0_i32 : i32
    %c0_i32_0 = arith.constant 0 : i32
    %c0_i32_1 = arith.constant 0 : i32
    %c0_i32_2 = arith.constant 0 : i32
    return %c0_i32_0, %2, %c0_i32_1 : i32, i32, i32
  }
  func.func @transform_1(%arg0: i32, %arg1: i32) -> (i32, i32, i32) {
    %c1_i32 = arith.constant 1 : i32
    %0 = arith.muli %arg0, %c1_i32 : i32
    %1 = arith.addi %0, %arg1 : i32
    %c0_i32 = arith.constant 0 : i32
    %2 = arith.minsi %1, %c0_i32 : i32
    %c0_i32_0 = arith.constant 0 : i32
    %c0_i32_1 = arith.constant 0 : i32
    %c0_i32_2 = arith.constant 0 : i32
    return %c0_i32_0, %2, %c0_i32_1 : i32, i32, i32
  }
  func.func @transform_2(%arg0: i32, %arg1: i32) -> (i32, i32, i32) {
    %c0_i32 = arith.constant 0 : i32
    %c0_i32_0 = arith.constant 0 : i32
    %c0_i32_1 = arith.constant 0 : i32
    return %arg0, %c0_i32, %c0_i32_0 : i32, i32, i32
  }
  func.func @transform_3(%arg0: i32, %arg1: i32) -> (i32, i32, i32) {
    %c0_i32 = arith.constant 0 : i32
    %c0_i32_0 = arith.constant 0 : i32
    %c0_i32_1 = arith.constant 0 : i32
    return %arg0, %c0_i32, %c0_i32_0 : i32, i32, i32
  }
}

</mosaic_0001>

<llo_original>
// kernel: tpu_custom_call.1
$region0: #{tpu_custom_call.1}
  #allocation0 [shape = 'u32[]', space=smem, size = 0x4, offset = 0x4, fixed_abs, tag = 'smem constant byte address 0x4 - core index']
  #allocation1 [shape = 'u32[144,128]{1,0:T(1,128)}', space=vmem, size = 0x12000, scoped, tag = 'internal scratch']
  %s0 = inlined_call_operand.hbm [shape: f32[8,2,128], index: 0, kind: input, shape index: {}]
  %s1 = inlined_call_operand.hbm [shape: f32[8,2,128], index: 1, kind: input, shape index: {}]
  %s2 = inlined_call_operand.hbm [shape: f32[1,2,128], index: 2, kind: output, shape index: {0}]
  %s3 = inlined_call_operand.hbm [shape: f32[1,2,128], index: 3, kind: output, shape index: {1}]
  %4 = xla_tuple %s2, %s3
  %s5 = sld [smem:[#allocation0]]
  $region38: #{tpu_custom_call.1} parent=0
    _
  %s7 = ssub.s32 1, %s5
  %s8 = scalar_select 0, %s7, %s5
  $region1: #{tpu_custom_call.1} parent=0
    #allocation2 [shape = 'u8[8192]{0}', space=vmem, size = 0x2000, scoped, tag = 'input window, operand 0, single buffered']
    #allocation3 [shape = 's32[1]{0}', space=sflag, size = 0x4, scoped, tag = 'scoped memory for tpu_custom_call.1']
    #allocation4 [shape = 's32[1]{0}', space=sflag, size = 0x4, scoped, tag = 'scoped memory for tpu_custom_call.1']
    #allocation5 [shape = 'u8[8192]{0}', space=vmem, size = 0x2000, scoped, tag = 'input window, operand 1, single buffered']
    #allocation6 [shape = 's32[1]{0}', space=sflag, size = 0x4, scoped, tag = 'scoped memory for tpu_custom_call.1']
    #allocation7 [shape = 'u8[1024]{0}', space=vmem, size = 0x400, scoped, tag = 'output window, operand 0, single buffered']
    #allocation8 [shape = 'u8[1024]{0}', space=vmem, size = 0x400, scoped, tag = 'output window, operand 1, single buffered']
    #allocation9 [shape = 's32[1]{0}', space=sflag, size = 0x4, scoped, tag = 'scoped memory for tpu_custom_call.1']
    %9 = vsyncpa [#allocation3], 0
    %10 = vsyncpa [#allocation6], 0
    %11 = vsyncpa [#allocation4], 0
    %12 = vsyncpa [#allocation9], 0
    // Predicated region
    $region2: #{tpu_custom_call.1} parent=1 // pred_check
      _
    $region3: #{tpu_custom_call.1} parent=1 // pred_check_branch
      %14 = sbr.rel (0) target = $region5
    $region4: #{tpu_custom_call.1} parent=1 // pred_region
      %s15 = sadd.s32 0, 0
      %p16 = scmp.lt.s32.totalorder %s15, 0
      %s17 = scalar_select %p16, %s15, 0
      %s19 = ssub.s32 256, 256
      %20 = vsyncadd [#allocation3], %s19
      %s21 = smul.addr %s17, 32
      %s22 = scalar_lea.hbm %s0, %s21
      %s23 = sshll.u32 [#allocation2], 4
      %s24 = int_to_ptr.vmem [resolvable:$true] %s23
      %29 = dma.hbm_to_vmem [thread:$0]  %s22, 256, %s24, [#allocation3], 32, 32, 2
    $region5: #{tpu_custom_call.1} parent=1 // pred_fallthru
      _
    // Predicated region
    $region6: #{tpu_custom_call.1} parent=1 // pred_check
      _
    $region7: #{tpu_custom_call.1} parent=1 // pred_check_branch
      %31 = sbr.rel (0) target = $region9
    $region8: #{tpu_custom_call.1} parent=1 // pred_region
      %s32 = sadd.s32 0, 0
      %p33 = scmp.lt.s32.totalorder %s32, 0
      %s34 = scalar_select %p33, %s32, 0
      %s36 = ssub.s32 256, 256
      %37 = vsyncadd [#allocation6], %s36
      %s38 = smul.addr %s34, 32
      %s39 = scalar_lea.hbm %s1, %s38
      %s40 = sshll.u32 [#allocation5], 4
      %s41 = int_to_ptr.vmem [resolvable:$true] %s40
      %46 = dma.hbm_to_vmem [thread:$0]  %s39, 256, %s41, [#allocation6], 32, 32, 2
    $region9: #{tpu_custom_call.1} parent=1 // pred_fallthru
      _
    // Predicated region
    $region10: #{tpu_custom_call.1} parent=1 // pred_check
      _
    $region11: #{tpu_custom_call.1} parent=1 // pred_check_branch
      %48 = sbr.rel (0) target = $region13
    $region12: #{tpu_custom_call.1} parent=1 // pred_region
      %49 = dma.done [#allocation3], 256
    $region13: #{tpu_custom_call.1} parent=1 // pred_fallthru
      _
    // Predicated region
    $region14: #{tpu_custom_call.1} parent=1 // pred_check
      _
    $region15: #{tpu_custom_call.1} parent=1 // pred_check_branch
      %51 = sbr.rel (0) target = $region17
    $region16: #{tpu_custom_call.1} parent=1 // pred_region
      %52 = dma.done [#allocation6], 256
    $region17: #{tpu_custom_call.1} parent=1 // pred_fallthru
      _
    %s53 = sadd.s32 0, 0
    %p54 = scmp.lt.s32.totalorder %s53, 0
    %s55 = scalar_select %p54, %s53, 0
    %s56 = sadd.s32 0, 0
    %p57 = scmp.lt.s32.totalorder %s56, 0
    %s58 = scalar_select %p57, %s56, 0
    %p59 = scmp.eq.s32.totalorder 0, 0
    // Predicated region
    $region18: #{tpu_custom_call.1} parent=1 // pred_check
      %p60 = pneg %p59
    $region19: #{tpu_custom_call.1} parent=1 // pred_check_branch
      %62 = sbr.rel (%p60) target = $region21
    $region20: #{tpu_custom_call.1} parent=1 // pred_region
      %63 = vst [vmem:[#allocation7] sm:$0x3] 0.0
      %64 = vst [vmem:[#allocation8] sm:$0x3] 0.0
    $region21: #{tpu_custom_call.1} parent=1 // pred_fallthru
      _
    %v65 = vld [vmem:[#allocation2] sm:$0x3]
    %v66 = vld [vmem:[#allocation2 + $0x2] sm:$0x3]
    %v67 = vld [vmem:[#allocation2 + $0x4] sm:$0x3]
    %v68 = vld [vmem:[#allocation2 + $0x6] sm:$0x3]
    %v69 = vld [vmem:[#allocation2 + $0x8] sm:$0x3]
    %v70 = vld [vmem:[#allocation2 + $0xa] sm:$0x3]
    %v71 = vld [vmem:[#allocation2 + $0xc] sm:$0x3]
    %v72 = vld [vmem:[#allocation2 + $0xe] sm:$0x3]
    %v73 = vld [vmem:[#allocation5] sm:$0x3]
    %v74 = vld [vmem:[#allocation5 + $0x2] sm:$0x3]
    %v75 = vld [vmem:[#allocation5 + $0x4] sm:$0x3]
    %v76 = vld [vmem:[#allocation5 + $0x6] sm:$0x3]
    %v77 = vld [vmem:[#allocation5 + $0x8] sm:$0x3]
    %v78 = vld [vmem:[#allocation5 + $0xa] sm:$0x3]
    %v79 = vld [vmem:[#allocation5 + $0xc] sm:$0x3]
    %v80 = vld [vmem:[#allocation5 + $0xe] sm:$0x3]
    %v81 = vsub.f32 %v65, %v73
    %v82 = vsub.f32 %v66, %v74
    %v83 = vsub.f32 %v67, %v75
    %v84 = vsub.f32 %v68, %v76
    %v85 = vsub.f32 %v69, %v77
    %v86 = vsub.f32 %v70, %v78
    %v87 = vsub.f32 %v71, %v79
    %v88 = vsub.f32 %v72, %v80
    %v89 = vld [vmem:[#allocation7] sm:$0x3]
    %v90 = vand.u32 2147483647, %v81
    %v91 = vand.u32 2147483647, %v82
    %v92 = vand.u32 2147483647, %v83
    %v93 = vand.u32 2147483647, %v84
    %v94 = vand.u32 2147483647, %v85
    %v95 = vand.u32 2147483647, %v86
    %v96 = vand.u32 2147483647, %v87
    %v97 = vand.u32 2147483647, %v88
    %vm98 = vcmask 1041408
    %v99 = vsel %vm98, %v90, 0.0
    %v100 = vsel %vm98, %v91, 0.0
    %v101 = vadd.f32 %v99, %v100
    %v102 = vsel %vm98, %v92, 0.0
    %v103 = vadd.f32 %v101, %v102
    %v104 = vsel %vm98, %v93, 0.0
    %v105 = vadd.f32 %v103, %v104
    %v106 = vsel %vm98, %v94, 0.0
    %v107 = vadd.f32 %v105, %v106
    %v108 = vsel %vm98, %v95, 0.0
    %v109 = vadd.f32 %v107, %v108
    %v110 = vsel %vm98, %v96, 0.0
    %v111 = vadd.f32 %v109, %v110
    %v112 = vsel %vm98, %v97, 0.0
    %v113 = vadd.f32 %v111, %v112
    %v114 = vadd.f32 %v89, %v113
    %115 = vst [vmem:[#allocation7] sm:$0x3] %v114
    %v116 = vmul.f32 %v81, %v81
    %v117 = vmul.f32 %v82, %v82
    %v118 = vmul.f32 %v83, %v83
    %v119 = vmul.f32 %v84, %v84
    %v120 = vmul.f32 %v85, %v85
    %v121 = vmul.f32 %v86, %v86
    %v122 = vmul.f32 %v87, %v87
    %v123 = vmul.f32 %v88, %v88
    %v124 = vsel %vm98, %v116, 0.0
    %v125 = vsel %vm98, %v117, 0.0
    %v126 = vadd.f32 %v124, %v125
    %v127 = vsel %vm98, %v118, 0.0
    %v128 = vadd.f32 %v126, %v127
    %v129 = vsel %vm98, %v119, 0.0
    %v130 = vadd.f32 %v128, %v129
    %v131 = vsel %vm98, %v120, 0.0
    %v132 = vsel %vm98, %v121, 0.0
    %v133 = vadd.f32 %v131, %v132
    %v134 = vsel %vm98, %v122, 0.0
    %v135 = vadd.f32 %v133, %v134
    %v136 = vsel %vm98, %v123, 0.0
    %v137 = vadd.f32 %v135, %v136
    %v138 = vld [vmem:[#allocation8] sm:$0x3]
    %v139 = vrsqrt.pop %v130
    %v140 = vmul.f32 %v130, %v139
    %vm141 = vcmp.eq.f32.partialorder %v130, inf
    %v142 = vsel %vm141, %v130, %v140
    %vm143 = vcmp.eq.f32.partialorder %v130, 0.0
    %v144 = vand.u32 %v130, 2147483648
    %v145 = vsel %vm143, %v144, %v142
    %v146 = vrsqrt.pop %v137
    %v147 = vmul.f32 %v137, %v146
    %vm148 = vcmp.eq.f32.partialorder %v137, inf
    %v149 = vsel %vm148, %v137, %v147
    %vm150 = vcmp.eq.f32.partialorder %v137, 0.0
    %v151 = vand.u32 %v137, 2147483648
    %v152 = vsel %vm150, %v151, %v149
    %v153 = vsel %vm98, %v145, 0.0
    %v154 = vsel %vm98, %v152, 0.0
    %v155 = vadd.f32 %v153, %v154
    %v156 = vadd.f32 %v138, %v155
    %157 = vst [vmem:[#allocation8] sm:$0x3] %v156
    // Predicated region
    $region22: #{tpu_custom_call.1} parent=1 // pred_check
      _
    $region23: #{tpu_custom_call.1} parent=1 // pred_check_branch
      %159 = sbr.rel (0) target = $region25
    $region24: #{tpu_custom_call.1} parent=1 // pred_region
      %s161 = ssub.s32 32, 32
      %162 = vsyncadd [#allocation4], %s161
      %s164 = sshll.u32 [#allocation7], 4
      %s165 = int_to_ptr.vmem [resolvable:$true] %s164
      %167 = dma.vmem_to_hbm [thread:$0]  %s165, 32, %s2, [#allocation4]
    $region25: #{tpu_custom_call.1} parent=1 // pred_fallthru
      _
    // Predicated region
    $region26: #{tpu_custom_call.1} parent=1 // pred_check
      _
    $region27: #{tpu_custom_call.1} parent=1 // pred_check_branch
      %169 = sbr.rel (0) target = $region29
    $region28: #{tpu_custom_call.1} parent=1 // pred_region
      %s171 = ssub.s32 32, 32
      %172 = vsyncadd [#allocation9], %s171
      %s174 = sshll.u32 [#allocation8], 4
      %s175 = int_to_ptr.vmem [resolvable:$true] %s174
      %177 = dma.vmem_to_hbm [thread:$0]  %s175, 32, %s3, [#allocation9]
    $region29: #{tpu_custom_call.1} parent=1 // pred_fallthru
      _
    // Predicated region
    $region30: #{tpu_custom_call.1} parent=1 // pred_check
      _
    $region31: #{tpu_custom_call.1} parent=1 // pred_check_branch
      %179 = sbr.rel (0) target = $region33
    $region32: #{tpu_custom_call.1} parent=1 // pred_region
      %180 = dma.done [#allocation4], 32
    $region33: #{tpu_custom_call.1} parent=1 // pred_fallthru
      _
    // Predicated region
    $region34: #{tpu_custom_call.1} parent=1 // pred_check
      _
    $region35: #{tpu_custom_call.1} parent=1 // pred_check_branch
      %182 = sbr.rel (0) target = $region37
    $region36: #{tpu_custom_call.1} parent=1 // pred_region
      %183 = dma.done [#allocation9], 32
    $region37: #{tpu_custom_call.1} parent=1 // pred_fallthru
      _
    %184 = vsyncpa [#allocation3], 1
    %185 = vsyncpa [#allocation6], 1
    %186 = vsyncpa [#allocation4], 1
    %187 = vsyncpa [#allocation9], 1

</llo_original>
